<compile_context>
chip_gen: v7x
topology: tpu7x:2x2x1
jax: 0.10.0
libtpu: 0.0.40
codegen_flags: <defaults>
</compile_context>

<pallas_src>
import functools

import jax
import jax.numpy as jnp
from jax.experimental import pallas as pl
from jax.experimental.pallas import tpu as pltpu


def _cdiv(a, b):
    return -(-a // b)


def _round_up(x, m):
    return _cdiv(x, m) * m


def _tpu_limits():
    """(VMEM capacity bytes, TensorCore count) with conservative fallbacks."""
    vmem_cap = 64 << 20          # v7x per-core VMEM; safe lower bound
    num_cores = 1
    try:
        info = pltpu.get_tpu_info()
        vmem_cap = int(getattr(info, "vmem_capacity_bytes", vmem_cap))
        for name in ("num_cores", "core_count", "num_tensorcores",
                     "tensor_core_count", "num_tensor_cores"):
            val = getattr(info, name, None)
            if val:
                num_cores = int(val)
                break
    except Exception:            # off-TPU tracing etc. -> conservative defaults
        pass
    return vmem_cap, num_cores


def _plan(n, p2, topk, w2, c_kv, itemsize, p2_chunk_override=None):
    """Pick (p2_chunk, unroll, num_chunks, kv_bufs, vmem_limit_bytes)."""
    vmem_cap, num_cores = _tpu_limits()
    sub = max(8, 32 // max(itemsize, 1))        # sublane packing (f32:8, bf16:16)
    lanes = 128
    kv_block = p2 * _round_up(w2, sub) * _round_up(c_kv, lanes) * itemsize
    row_bytes = _round_up(topk * w2, sub) * _round_up(c_kv, lanes) * itemsize

    headroom = 2 << 20
    usable = vmem_cap - headroom

    # kv[b] stays resident for all chunks of batch b; double-buffer it only
    # when that does not squeeze the output block (matters on 64 MiB v7x VMEM).
    kv_bufs = 2 if 2 * kv_block <= usable // 2 else 1
    if kv_bufs * kv_block + 2 * row_bytes > usable:
        raise ValueError(
            "KVGather: kv[b] plus one double-buffered output row does not fit "
            f"in VMEM (need {kv_bufs * kv_block + 2 * row_bytes} B, "
            f"have {usable} B).")

    # Big lane-dense output slabs amortize the ~0.35us/step pipeline overhead.
    out_cap = (16 << 20) if vmem_cap >= (96 << 20) else (6 << 20)
    out_budget = min((usable - kv_bufs * kv_block) // 2, out_cap)
    max_chunk = max(1, min(p2, out_budget // row_bytes))

    if p2_chunk_override is not None:
        p2_chunk = max(1, min(int(p2_chunk_override), max_chunk))
    else:
        p2_chunk = max_chunk
        # Feed every TensorCore even when n is small (v7x: 2 TCs per chip).
        if num_cores > 1 and n * _cdiv(p2, p2_chunk) < num_cores:
            p2_chunk = max(1, _cdiv(p2, _cdiv(num_cores, n)))
        # Prefer an exact divisor of p2 when one is close to the budget-derived
        # chunk, so common shapes avoid the ragged last block entirely.
        best_div = max(d for d in range(1, p2_chunk + 1) if p2 % d == 0)
        if 2 * best_div >= p2_chunk:
            p2_chunk = best_div

    num_chunks = _cdiv(p2, p2_chunk)
    unroll = min(8, p2_chunk)

    out_block = p2_chunk * row_bytes
    vmem_limit = min(kv_bufs * kv_block + 2 * out_block + headroom, vmem_cap)
    return p2_chunk, unroll, num_chunks, kv_bufs, int(vmem_limit)


def _kv_gather_kernel(mul_weight, p2_pad, p2_chunk, topk, w2, unroll,
                      idx_ref, w_ref, kv_ref, out_ref):
    # idx_ref: SMEM (n * p2_pad * topk,) int32   (scalar-prefetched, pre-clamped)
    # w_ref:   SMEM (n * p2_pad * topk,) float32 (scalar-prefetched)
    # kv_ref:  VMEM (p2, w2, c_kv)               whole kv[b], resident per batch
    # out_ref: VMEM (p2_chunk, topk*w2, c_kv)    lane-dense output slab
    b = pl.program_id(0)
    pc = pl.program_id(1)
    base = (b * p2_pad + pc * p2_chunk) * topk   # flat offset into idx/w SMEM

    def do_row(i, r):
        # Output row i of this slab; r = flat SMEM offset of its (i, k=0) entry.
        for k in range(topk):                     # static unroll over topk
            tile = kv_ref[idx_ref[r + k]]         # (w2, c_kv) gather from VMEM
            if mul_weight == "soft":
                # Weight cast to kv dtype before the multiply (matches the
                # reference output dtype; note: slightly lower precision than
                # multiplying in f32 for bf16 kv).
                tile = tile * w_ref[r + k].astype(tile.dtype)
            out_ref[i, pl.ds(k * w2, w2), :] = tile

    n_main = p2_chunk // unroll

    @pl.loop(0, n_main)
    def _(j):
        i0 = j * unroll
        r0 = base + i0 * topk
        for u in range(unroll):                   # static unroll: interleaves the
            do_row(i0 + u, r0 + u * topk)         # scalar math of many tiles

    for i in range(n_main * unroll, p2_chunk):    # static ragged tail
        do_row(i, base + i * topk)


def kv_gather(r_idx, r_weight, kv, mul_weight="none", *, p2_chunk=None):
    """Pallas equivalent of KVGather.forward.

    r_idx:    (n, p2, topk) int   -- values are clamped to [0, p2-1]
    r_weight: (n, p2, topk) float
    kv:       (n, p2, w2, c_kv)
    returns:  (n, p2, topk, w2, c_kv)
    """
    assert mul_weight in ("none", "soft", "hard")
    if mul_weight == "hard":
        # Matches the PyTorch reference behavior.
        raise NotImplementedError("differentiable hard routing TBA")

    n, p2, w2, c_kv = kv.shape
    topk = r_idx.shape[-1]
    itemsize = jnp.dtype(kv.dtype).itemsize

    p2_chunk, unroll, num_chunks, kv_bufs, vmem_limit = _plan(
        n, p2, topk, w2, c_kv, itemsize, p2_chunk)
    p2_pad = num_chunks * p2_chunk

    # Pre-clamp indices (one fused XLA op, off the in-kernel scalar path) and
    # flatten to 1-D so SMEM is not padded by a (n, p2, topk) layout.  When the
    # chunking is ragged, zero-pad so every SMEM read in the kernel is in
    # bounds; the matching out-of-bounds output rows are dropped on writeback.
    idx = jnp.clip(r_idx.astype(jnp.int32), 0, p2 - 1)
    wgt = r_weight.astype(jnp.float32)
    if p2_pad != p2:
        pad = ((0, 0), (0, p2_pad - p2), (0, 0))
        idx = jnp.pad(idx, pad)
        wgt = jnp.pad(wgt, pad)
    idx_flat = idx.reshape(-1)
    w_flat = wgt.reshape(-1)

    kernel = functools.partial(
        _kv_gather_kernel, mul_weight, p2_pad, p2_chunk, topk, w2, unroll)

    # kv[b] resident in VMEM for every chunk of batch b: the index_map ignores
    # the (fast) chunk axis, so kv is DMA'd once per batch, not once per step.
    kv_spec_kwargs = {}
    if kv_bufs == 1:
        kv_spec_kwargs["pipeline_mode"] = pl.Buffered(1)
    kv_spec = pl.BlockSpec((None, p2, w2, c_kv),
                           lambda b, pc, idx_r, w_r: (b, 0, 0, 0),
                           **kv_spec_kwargs)

    grid_spec = pltpu.PrefetchScalarGridSpec(
        num_scalar_prefetch=2,              # r_idx, r_weight land in SMEM
        grid=(n, num_chunks),               # chunk axis fastest; kv reused per b
        in_specs=[kv_spec],
        out_specs=pl.BlockSpec(
            (None, p2_chunk, topk * w2, c_kv),
            lambda b, pc, idx_r, w_r: (b, pc, 0, 0)),
    )

    out = pl.pallas_call(
        kernel,
        grid_spec=grid_spec,
        # Last two dims (topk*w2, c_kv) stay lane/sublane dense even when w2 is
        # not a multiple of 8/16 (e.g. 7x7 windows); reshaped back to 5-D below.
        out_shape=jax.ShapeDtypeStruct((n, p2, topk * w2, c_kv), kv.dtype),
        compiler_params=pltpu.CompilerParams(
            dimension_semantics=("parallel", "parallel"),
            vmem_limit_bytes=vmem_limit),
    )(idx_flat, w_flat, kv)

    return out.reshape(n, p2, topk, w2, c_kv)


def _kv_gather_ref(r_idx, r_weight, kv, mul_weight="none"):
    """Pure-JAX reference mirroring the PyTorch torch.gather semantics."""
    n, p2, w2, c_kv = kv.shape
    gathered = jnp.take_along_axis(
        jnp.broadcast_to(kv[:, None], (n, p2, p2, w2, c_kv)),
        jnp.clip(r_idx, 0, p2 - 1).astype(jnp.int32)[:, :, :, None, None],
        axis=2,
    )  # (n, p2, topk, w2, c_kv)
    if mul_weight == "soft":
        gathered = r_weight[:, :, :, None, None].astype(kv.dtype) * gathered
    return gathered


if __name__ == "__main__":
    key = jax.random.PRNGKey(0)
    ks = jax.random.split(key, 9)

    # Test 1: n=2 batches, p^2=8 regions, w^2=16 tokens/region, c_kv=128, topk=2.
    n, p2, w2, c_kv, topk = 2, 8, 16, 128, 2
    kv = jax.random.normal(ks[0], (n, p2, w2, c_kv), dtype=jnp.float32)
    r_idx = jax.random.randint(ks[1], (n, p2, topk), 0, p2, dtype=jnp.int32)
    r_w = jax.random.uniform(ks[2], (n, p2, topk), dtype=jnp.float32)

    out_soft = jax.block_until_ready(kv_gather(r_idx, r_w, kv, "soft"))
    out_none = jax.block_until_ready(kv_gather(r_idx, r_w, kv, "none"))
    assert out_soft.shape == (n, p2, topk, w2, c_kv)
    assert jnp.allclose(out_soft, _kv_gather_ref(r_idx, r_w, kv, "soft"),
                        atol=1e-6, rtol=1e-6)
    assert jnp.allclose(out_none, _kv_gather_ref(r_idx, r_w, kv, "none"),
                        atol=1e-6, rtol=1e-6)

    # Test 2: forced non-dividing chunk (p2=16, chunk=10) exercises cdiv
    # chunking with a ragged last block, zero-padded prefetch scalars, and the
    # static unroll tail.
    n2, p2b, w2b, ckvb, topkb = 1, 16, 16, 128, 3
    kv2 = jax.random.normal(ks[3], (n2, p2b, w2b, ckvb), dtype=jnp.float32)
    idx2 = jax.random.randint(ks[4], (n2, p2b, topkb), 0, p2b, dtype=jnp.int32)
    rw2 = jax.random.uniform(ks[5], (n2, p2b, topkb), dtype=jnp.float32)
    out2 = jax.block_until_ready(kv_gather(idx2, rw2, kv2, "soft", p2_chunk=10))
    assert out2.shape == (n2, p2b, topkb, w2b, ckvb)
    assert jnp.allclose(out2, _kv_gather_ref(idx2, rw2, kv2, "soft"),
                        atol=1e-6, rtol=1e-6)

    # Test 3: bf16 kv (sublane-packed dtype).
    n3, p2c, w2c, ckvc, topkc = 1, 4, 16, 128, 2
    kv3 = jax.random.normal(ks[6], (n3, p2c, w2c, ckvc), dtype=jnp.bfloat16)
    idx3 = jax.random.randint(ks[7], (n3, p2c, topkc), 0, p2c, dtype=jnp.int32)
    rw3 = jax.random.uniform(ks[8], (n3, p2c, topkc), dtype=jnp.float32)
    out3 = jax.block_until_ready(kv_gather(idx3, rw3, kv3, "soft"))
    ref3 = _kv_gather_ref(idx3, rw3, kv3, "soft")
    assert jnp.allclose(out3.astype(jnp.float32), ref3.astype(jnp.float32),
                        atol=2e-2, rtol=2e-2)

    # 'hard' must raise, matching the PyTorch reference.
    try:
        kv_gather(r_idx, r_w, kv, "hard")
        raise AssertionError("expected NotImplementedError for mul_weight='hard'")
    except NotImplementedError:
        pass

    print("KERNEL_OK")
</pallas_src>

<mosaic_0001>
module attributes {stable_mosaic.version = 11 : i64} {
  func.func @_kv_gather_kernel(%arg0: i32, %arg1: i32, %arg2: memref<32xi32, #tpu.memory_space<smem>>, %arg3: memref<32xf32, #tpu.memory_space<smem>>, %arg4: memref<1x8x16x128xf32, #tpu.memory_space<vmem>>, %arg5: memref<1x8x32x128xf32, #tpu.memory_space<vmem>>) attributes {dimension_semantics = [#tpu.dimension_semantics<parallel>, #tpu.dimension_semantics<parallel>], iteration_bounds = array<i64: 2, 1>, scalar_prefetch = 2 : i64, scratch_operands = 0 : i64, tpu.core_type = #tpu.core_type<tc>, window_params = [{transform_indices = @transform_0, window_bounds = array<i64: 1, 8, 16, 128>}, {transform_indices = @transform_1, window_bounds = array<i64: 1, 8, 32, 128>}]} {
    %c8_i32 = arith.constant 8 : i32
    %0 = arith.muli %arg0, %c8_i32 : i32
    %c8_i32_0 = arith.constant 8 : i32
    %1 = arith.muli %arg1, %c8_i32_0 : i32
    %2 = arith.addi %0, %1 : i32
    %c2_i32 = arith.constant 2 : i32
    %3 = arith.muli %2, %c2_i32 : i32
    %c0_i32 = arith.constant 0 : i32
    %c1_i32 = arith.constant 1 : i32
    %4 = arith.muli %c0_i32, %c1_i32 : i32
    %c0_i32_1 = arith.constant 0 : i32
    %5 = arith.addi %c0_i32_1, %4 : i32
    %c8_i32_2 = arith.constant 8 : i32
    %6 = arith.muli %5, %c8_i32_2 : i32
    %c2_i32_3 = arith.constant 2 : i32
    %7 = arith.muli %6, %c2_i32_3 : i32
    %8 = arith.addi %3, %7 : i32
    %c0_i32_4 = arith.constant 0 : i32
    %9 = arith.addi %6, %c0_i32_4 : i32
    %c0_i32_5 = arith.constant 0 : i32
    %10 = arith.addi %8, %c0_i32_5 : i32
    %c0_i32_6 = arith.constant 0 : i32
    %11 = arith.addi %10, %c0_i32_6 : i32
    %12 = arith.index_cast %11 : i32 to index
    %13 = memref.load %arg2[%12] : memref<32xi32, #tpu.memory_space<smem>>
    %c0 = arith.constant 0 : index
    %14 = arith.index_cast %13 : i32 to index
    %c0_7 = arith.constant 0 : index
    %c0_8 = arith.constant 0 : index
    %15 = vector.load %arg4[%c0, %14, %c0_7, %c0_8] : memref<1x8x16x128xf32, #tpu.memory_space<vmem>>, vector<1x1x16x128xf32>
    %16 = vector.shape_cast %15 : vector<1x1x16x128xf32> to vector<16x128xf32>
    %c0_i32_9 = arith.constant 0 : i32
    %17 = arith.addi %10, %c0_i32_9 : i32
    %18 = arith.index_cast %17 : i32 to index
    %19 = memref.load %arg3[%18] : memref<32xf32, #tpu.memory_space<smem>>
    %20 = vector.broadcast %19 : f32 to vector<16x128xf32>
    %21 = arith.mulf %16, %20 : vector<16x128xf32>
    %c0_10 = arith.constant 0 : index
    %22 = arith.index_cast %9 : i32 to index
    %c0_11 = arith.constant 0 : index
    %c0_12 = arith.constant 0 : index
    %23 = vector.load %arg5[%c0_10, %22, %c0_11, %c0_12] : memref<1x8x32x128xf32, #tpu.memory_space<vmem>>, vector<1x1x16x128xf32>
    %24 = vector.shape_cast %23 : vector<1x1x16x128xf32> to vector<16x128xf32>
    %25 = vector.shape_cast %21 : vector<16x128xf32> to vector<1x1x16x128xf32>
    tpu.vector_store %arg5[%c0_10, %22, %c0_11, %c0_12], %25 {strides = array<i32>} : memref<1x8x32x128xf32, #tpu.memory_space<vmem>>, vector<1x1x16x128xf32>,
    %c1_i32_13 = arith.constant 1 : i32
    %26 = arith.addi %10, %c1_i32_13 : i32
    %27 = arith.index_cast %26 : i32 to index
    %28 = memref.load %arg2[%27] : memref<32xi32, #tpu.memory_space<smem>>
    %c0_14 = arith.constant 0 : index
    %29 = arith.index_cast %28 : i32 to index
    %c0_15 = arith.constant 0 : index
    %c0_16 = arith.constant 0 : index
    %30 = vector.load %arg4[%c0_14, %29, %c0_15, %c0_16] : memref<1x8x16x128xf32, #tpu.memory_space<vmem>>, vector<1x1x16x128xf32>
    %31 = vector.shape_cast %30 : vector<1x1x16x128xf32> to vector<16x128xf32>
    %c1_i32_17 = arith.constant 1 : i32
    %32 = arith.addi %10, %c1_i32_17 : i32
    %33 = arith.index_cast %32 : i32 to index
    %34 = memref.load %arg3[%33] : memref<32xf32, #tpu.memory_space<smem>>
    %35 = vector.broadcast %34 : f32 to vector<16x128xf32>
    %36 = arith.mulf %31, %35 : vector<16x128xf32>
    %c0_18 = arith.constant 0 : index
    %37 = arith.index_cast %9 : i32 to index
    %c16 = arith.constant 16 : index
    %c0_19 = arith.constant 0 : index
    %38 = vector.load %arg5[%c0_18, %37, %c16, %c0_19] : memref<1x8x32x128xf32, #tpu.memory_space<vmem>>, vector<1x1x16x128xf32>
    %39 = vector.shape_cast %38 : vector<1x1x16x128xf32> to vector<16x128xf32>
    %40 = vector.shape_cast %36 : vector<16x128xf32> to vector<1x1x16x128xf32>
    tpu.vector_store %arg5[%c0_18, %37, %c16, %c0_19], %40 {strides = array<i32>} : memref<1x8x32x128xf32, #tpu.memory_space<vmem>>, vector<1x1x16x128xf32>,
    %c1_i32_20 = arith.constant 1 : i32
    %41 = arith.addi %6, %c1_i32_20 : i32
    %c2_i32_21 = arith.constant 2 : i32
    %42 = arith.addi %8, %c2_i32_21 : i32
    %c0_i32_22 = arith.constant 0 : i32
    %43 = arith.addi %42, %c0_i32_22 : i32
    %44 = arith.index_cast %43 : i32 to index
    %45 = memref.load %arg2[%44] : memref<32xi32, #tpu.memory_space<smem>>
    %c0_23 = arith.constant 0 : index
    %46 = arith.index_cast %45 : i32 to index
    %c0_24 = arith.constant 0 : index
    %c0_25 = arith.constant 0 : index
    %47 = vector.load %arg4[%c0_23, %46, %c0_24, %c0_25] : memref<1x8x16x128xf32, #tpu.memory_space<vmem>>, vector<1x1x16x128xf32>
    %48 = vector.shape_cast %47 : vector<1x1x16x128xf32> to vector<16x128xf32>
    %c0_i32_26 = arith.constant 0 : i32
    %49 = arith.addi %42, %c0_i32_26 : i32
    %50 = arith.index_cast %49 : i32 to index
    %51 = memref.load %arg3[%50] : memref<32xf32, #tpu.memory_space<smem>>
    %52 = vector.broadcast %51 : f32 to vector<16x128xf32>
    %53 = arith.mulf %48, %52 : vector<16x128xf32>
    %c0_27 = arith.constant 0 : index
    %54 = arith.index_cast %41 : i32 to index
    %c0_28 = arith.constant 0 : index
    %c0_29 = arith.constant 0 : index
    %55 = vector.load %arg5[%c0_27, %54, %c0_28, %c0_29] : memref<1x8x32x128xf32, #tpu.memory_space<vmem>>, vector<1x1x16x128xf32>
    %56 = vector.shape_cast %55 : vector<1x1x16x128xf32> to vector<16x128xf32>
    %57 = vector.shape_cast %53 : vector<16x128xf32> to vector<1x1x16x128xf32>
    tpu.vector_store %arg5[%c0_27, %54, %c0_28, %c0_29], %57 {strides = array<i32>} : memref<1x8x32x128xf32, #tpu.memory_space<vmem>>, vector<1x1x16x128xf32>,
    %c1_i32_30 = arith.constant 1 : i32
    %58 = arith.addi %42, %c1_i32_30 : i32
    %59 = arith.index_cast %58 : i32 to index
    %60 = memref.load %arg2[%59] : memref<32xi32, #tpu.memory_space<smem>>
    %c0_31 = arith.constant 0 : index
    %61 = arith.index_cast %60 : i32 to index
    %c0_32 = arith.constant 0 : index
    %c0_33 = arith.constant 0 : index
    %62 = vector.load %arg4[%c0_31, %61, %c0_32, %c0_33] : memref<1x8x16x128xf32, #tpu.memory_space<vmem>>, vector<1x1x16x128xf32>
    %63 = vector.shape_cast %62 : vector<1x1x16x128xf32> to vector<16x128xf32>
    %c1_i32_34 = arith.constant 1 : i32
    %64 = arith.addi %42, %c1_i32_34 : i32
    %65 = arith.index_cast %64 : i32 to index
    %66 = memref.load %arg3[%65] : memref<32xf32, #tpu.memory_space<smem>>
    %67 = vector.broadcast %66 : f32 to vector<16x128xf32>
    %68 = arith.mulf %63, %67 : vector<16x128xf32>
    %c0_35 = arith.constant 0 : index
    %69 = arith.index_cast %41 : i32 to index
    %c16_36 = arith.constant 16 : index
    %c0_37 = arith.constant 0 : index
    %70 = vector.load %arg5[%c0_35, %69, %c16_36, %c0_37] : memref<1x8x32x128xf32, #tpu.memory_space<vmem>>, vector<1x1x16x128xf32>
    %71 = vector.shape_cast %70 : vector<1x1x16x128xf32> to vector<16x128xf32>
    %72 = vector.shape_cast %68 : vector<16x128xf32> to vector<1x1x16x128xf32>
    tpu.vector_store %arg5[%c0_35, %69, %c16_36, %c0_37], %72 {strides = array<i32>} : memref<1x8x32x128xf32, #tpu.memory_space<vmem>>, vector<1x1x16x128xf32>,
    %c2_i32_38 = arith.constant 2 : i32
    %73 = arith.addi %6, %c2_i32_38 : i32
    %c4_i32 = arith.constant 4 : i32
    %74 = arith.addi %8, %c4_i32 : i32
    %c0_i32_39 = arith.constant 0 : i32
    %75 = arith.addi %74, %c0_i32_39 : i32
    %76 = arith.index_cast %75 : i32 to index
    %77 = memref.load %arg2[%76] : memref<32xi32, #tpu.memory_space<smem>>
    %c0_40 = arith.constant 0 : index
    %78 = arith.index_cast %77 : i32 to index
    %c0_41 = arith.constant 0 : index
    %c0_42 = arith.constant 0 : index
    %79 = vector.load %arg4[%c0_40, %78, %c0_41, %c0_42] : memref<1x8x16x128xf32, #tpu.memory_space<vmem>>, vector<1x1x16x128xf32>
    %80 = vector.shape_cast %79 : vector<1x1x16x128xf32> to vector<16x128xf32>
    %c0_i32_43 = arith.constant 0 : i32
    %81 = arith.addi %74, %c0_i32_43 : i32
    %82 = arith.index_cast %81 : i32 to index
    %83 = memref.load %arg3[%82] : memref<32xf32, #tpu.memory_space<smem>>
    %84 = vector.broadcast %83 : f32 to vector<16x128xf32>
    %85 = arith.mulf %80, %84 : vector<16x128xf32>
    %c0_44 = arith.constant 0 : index
    %86 = arith.index_cast %73 : i32 to index
    %c0_45 = arith.constant 0 : index
    %c0_46 = arith.constant 0 : index
    %87 = vector.load %arg5[%c0_44, %86, %c0_45, %c0_46] : memref<1x8x32x128xf32, #tpu.memory_space<vmem>>, vector<1x1x16x128xf32>
    %88 = vector.shape_cast %87 : vector<1x1x16x128xf32> to vector<16x128xf32>
    %89 = vector.shape_cast %85 : vector<16x128xf32> to vector<1x1x16x128xf32>
    tpu.vector_store %arg5[%c0_44, %86, %c0_45, %c0_46], %89 {strides = array<i32>} : memref<1x8x32x128xf32, #tpu.memory_space<vmem>>, vector<1x1x16x128xf32>,
    %c1_i32_47 = arith.constant 1 : i32
    %90 = arith.addi %74, %c1_i32_47 : i32
    %91 = arith.index_cast %90 : i32 to index
    %92 = memref.load %arg2[%91] : memref<32xi32, #tpu.memory_space<smem>>
    %c0_48 = arith.constant 0 : index
    %93 = arith.index_cast %92 : i32 to index
    %c0_49 = arith.constant 0 : index
    %c0_50 = arith.constant 0 : index
    %94 = vector.load %arg4[%c0_48, %93, %c0_49, %c0_50] : memref<1x8x16x128xf32, #tpu.memory_space<vmem>>, vector<1x1x16x128xf32>
    %95 = vector.shape_cast %94 : vector<1x1x16x128xf32> to vector<16x128xf32>
    %c1_i32_51 = arith.constant 1 : i32
    %96 = arith.addi %74, %c1_i32_51 : i32
    %97 = arith.index_cast %96 : i32 to index
    %98 = memref.load %arg3[%97] : memref<32xf32, #tpu.memory_space<smem>>
    %99 = vector.broadcast %98 : f32 to vector<16x128xf32>
    %100 = arith.mulf %95, %99 : vector<16x128xf32>
    %c0_52 = arith.constant 0 : index
    %101 = arith.index_cast %73 : i32 to index
    %c16_53 = arith.constant 16 : index
    %c0_54 = arith.constant 0 : index
    %102 = vector.load %arg5[%c0_52, %101, %c16_53, %c0_54] : memref<1x8x32x128xf32, #tpu.memory_space<vmem>>, vector<1x1x16x128xf32>
    %103 = vector.shape_cast %102 : vector<1x1x16x128xf32> to vector<16x128xf32>
    %104 = vector.shape_cast %100 : vector<16x128xf32> to vector<1x1x16x128xf32>
    tpu.vector_store %arg5[%c0_52, %101, %c16_53, %c0_54], %104 {strides = array<i32>} : memref<1x8x32x128xf32, #tpu.memory_space<vmem>>, vector<1x1x16x128xf32>,
    %c3_i32 = arith.constant 3 : i32
    %105 = arith.addi %6, %c3_i32 : i32
    %c6_i32 = arith.constant 6 : i32
    %106 = arith.addi %8, %c6_i32 : i32
    %c0_i32_55 = arith.constant 0 : i32
    %107 = arith.addi %106, %c0_i32_55 : i32
    %108 = arith.index_cast %107 : i32 to index
    %109 = memref.load %arg2[%108] : memref<32xi32, #tpu.memory_space<smem>>
    %c0_56 = arith.constant 0 : index
    %110 = arith.index_cast %109 : i32 to index
    %c0_57 = arith.constant 0 : index
    %c0_58 = arith.constant 0 : index
    %111 = vector.load %arg4[%c0_56, %110, %c0_57, %c0_58] : memref<1x8x16x128xf32, #tpu.memory_space<vmem>>, vector<1x1x16x128xf32>
    %112 = vector.shape_cast %111 : vector<1x1x16x128xf32> to vector<16x128xf32>
    %c0_i32_59 = arith.constant 0 : i32
    %113 = arith.addi %106, %c0_i32_59 : i32
    %114 = arith.index_cast %113 : i32 to index
    %115 = memref.load %arg3[%114] : memref<32xf32, #tpu.memory_space<smem>>
    %116 = vector.broadcast %115 : f32 to vector<16x128xf32>
    %117 = arith.mulf %112, %116 : vector<16x128xf32>
    %c0_60 = arith.constant 0 : index
    %118 = arith.index_cast %105 : i32 to index
    %c0_61 = arith.constant 0 : index
    %c0_62 = arith.constant 0 : index
    %119 = vector.load %arg5[%c0_60, %118, %c0_61, %c0_62] : memref<1x8x32x128xf32, #tpu.memory_space<vmem>>, vector<1x1x16x128xf32>
    %120 = vector.shape_cast %119 : vector<1x1x16x128xf32> to vector<16x128xf32>
    %121 = vector.shape_cast %117 : vector<16x128xf32> to vector<1x1x16x128xf32>
    tpu.vector_store %arg5[%c0_60, %118, %c0_61, %c0_62], %121 {strides = array<i32>} : memref<1x8x32x128xf32, #tpu.memory_space<vmem>>, vector<1x1x16x128xf32>,
    %c1_i32_63 = arith.constant 1 : i32
    %122 = arith.addi %106, %c1_i32_63 : i32
    %123 = arith.index_cast %122 : i32 to index
    %124 = memref.load %arg2[%123] : memref<32xi32, #tpu.memory_space<smem>>
    %c0_64 = arith.constant 0 : index
    %125 = arith.index_cast %124 : i32 to index
    %c0_65 = arith.constant 0 : index
    %c0_66 = arith.constant 0 : index
    %126 = vector.load %arg4[%c0_64, %125, %c0_65, %c0_66] : memref<1x8x16x128xf32, #tpu.memory_space<vmem>>, vector<1x1x16x128xf32>
    %127 = vector.shape_cast %126 : vector<1x1x16x128xf32> to vector<16x128xf32>
    %c1_i32_67 = arith.constant 1 : i32
    %128 = arith.addi %106, %c1_i32_67 : i32
    %129 = arith.index_cast %128 : i32 to index
    %130 = memref.load %arg3[%129] : memref<32xf32, #tpu.memory_space<smem>>
    %131 = vector.broadcast %130 : f32 to vector<16x128xf32>
    %132 = arith.mulf %127, %131 : vector<16x128xf32>
    %c0_68 = arith.constant 0 : index
    %133 = arith.index_cast %105 : i32 to index
    %c16_69 = arith.constant 16 : index
    %c0_70 = arith.constant 0 : index
    %134 = vector.load %arg5[%c0_68, %133, %c16_69, %c0_70] : memref<1x8x32x128xf32, #tpu.memory_space<vmem>>, vector<1x1x16x128xf32>
    %135 = vector.shape_cast %134 : vector<1x1x16x128xf32> to vector<16x128xf32>
    %136 = vector.shape_cast %132 : vector<16x128xf32> to vector<1x1x16x128xf32>
    tpu.vector_store %arg5[%c0_68, %133, %c16_69, %c0_70], %136 {strides = array<i32>} : memref<1x8x32x128xf32, #tpu.memory_space<vmem>>, vector<1x1x16x128xf32>,
    %c4_i32_71 = arith.constant 4 : i32
    %137 = arith.addi %6, %c4_i32_71 : i32
    %c8_i32_72 = arith.constant 8 : i32
    %138 = arith.addi %8, %c8_i32_72 : i32
    %c0_i32_73 = arith.constant 0 : i32
    %139 = arith.addi %138, %c0_i32_73 : i32
    %140 = arith.index_cast %139 : i32 to index
    %141 = memref.load %arg2[%140] : memref<32xi32, #tpu.memory_space<smem>>
    %c0_74 = arith.constant 0 : index
    %142 = arith.index_cast %141 : i32 to index
    %c0_75 = arith.constant 0 : index
    %c0_76 = arith.constant 0 : index
    %143 = vector.load %arg4[%c0_74, %142, %c0_75, %c0_76] : memref<1x8x16x128xf32, #tpu.memory_space<vmem>>, vector<1x1x16x128xf32>
    %144 = vector.shape_cast %143 : vector<1x1x16x128xf32> to vector<16x128xf32>
    %c0_i32_77 = arith.constant 0 : i32
    %145 = arith.addi %138, %c0_i32_77 : i32
    %146 = arith.index_cast %145 : i32 to index
    %147 = memref.load %arg3[%146] : memref<32xf32, #tpu.memory_space<smem>>
    %148 = vector.broadcast %147 : f32 to vector<16x128xf32>
    %149 = arith.mulf %144, %148 : vector<16x128xf32>
    %c0_78 = arith.constant 0 : index
    %150 = arith.index_cast %137 : i32 to index
    %c0_79 = arith.constant 0 : index
    %c0_80 = arith.constant 0 : index
    %151 = vector.load %arg5[%c0_78, %150, %c0_79, %c0_80] : memref<1x8x32x128xf32, #tpu.memory_space<vmem>>, vector<1x1x16x128xf32>
    %152 = vector.shape_cast %151 : vector<1x1x16x128xf32> to vector<16x128xf32>
    %153 = vector.shape_cast %149 : vector<16x128xf32> to vector<1x1x16x128xf32>
    tpu.vector_store %arg5[%c0_78, %150, %c0_79, %c0_80], %153 {strides = array<i32>} : memref<1x8x32x128xf32, #tpu.memory_space<vmem>>, vector<1x1x16x128xf32>,
    %c1_i32_81 = arith.constant 1 : i32
    %154 = arith.addi %138, %c1_i32_81 : i32
    %155 = arith.index_cast %154 : i32 to index
    %156 = memref.load %arg2[%155] : memref<32xi32, #tpu.memory_space<smem>>
    %c0_82 = arith.constant 0 : index
    %157 = arith.index_cast %156 : i32 to index
    %c0_83 = arith.constant 0 : index
    %c0_84 = arith.constant 0 : index
    %158 = vector.load %arg4[%c0_82, %157, %c0_83, %c0_84] : memref<1x8x16x128xf32, #tpu.memory_space<vmem>>, vector<1x1x16x128xf32>
    %159 = vector.shape_cast %158 : vector<1x1x16x128xf32> to vector<16x128xf32>
    %c1_i32_85 = arith.constant 1 : i32
    %160 = arith.addi %138, %c1_i32_85 : i32
    %161 = arith.index_cast %160 : i32 to index
    %162 = memref.load %arg3[%161] : memref<32xf32, #tpu.memory_space<smem>>
    %163 = vector.broadcast %162 : f32 to vector<16x128xf32>
    %164 = arith.mulf %159, %163 : vector<16x128xf32>
    %c0_86 = arith.constant 0 : index
    %165 = arith.index_cast %137 : i32 to index
    %c16_87 = arith.constant 16 : index
    %c0_88 = arith.constant 0 : index
    %166 = vector.load %arg5[%c0_86, %165, %c16_87, %c0_88] : memref<1x8x32x128xf32, #tpu.memory_space<vmem>>, vector<1x1x16x128xf32>
    %167 = vector.shape_cast %166 : vector<1x1x16x128xf32> to vector<16x128xf32>
    %168 = vector.shape_cast %164 : vector<16x128xf32> to vector<1x1x16x128xf32>
    tpu.vector_store %arg5[%c0_86, %165, %c16_87, %c0_88], %168 {strides = array<i32>} : memref<1x8x32x128xf32, #tpu.memory_space<vmem>>, vector<1x1x16x128xf32>,
    %c5_i32 = arith.constant 5 : i32
    %169 = arith.addi %6, %c5_i32 : i32
    %c10_i32 = arith.constant 10 : i32
    %170 = arith.addi %8, %c10_i32 : i32
    %c0_i32_89 = arith.constant 0 : i32
    %171 = arith.addi %170, %c0_i32_89 : i32
    %172 = arith.index_cast %171 : i32 to index
    %173 = memref.load %arg2[%172] : memref<32xi32, #tpu.memory_space<smem>>
    %c0_90 = arith.constant 0 : index
    %174 = arith.index_cast %173 : i32 to index
    %c0_91 = arith.constant 0 : index
    %c0_92 = arith.constant 0 : index
    %175 = vector.load %arg4[%c0_90, %174, %c0_91, %c0_92] : memref<1x8x16x128xf32, #tpu.memory_space<vmem>>, vector<1x1x16x128xf32>
    %176 = vector.shape_cast %175 : vector<1x1x16x128xf32> to vector<16x128xf32>
    %c0_i32_93 = arith.constant 0 : i32
    %177 = arith.addi %170, %c0_i32_93 : i32
    %178 = arith.index_cast %177 : i32 to index
    %179 = memref.load %arg3[%178] : memref<32xf32, #tpu.memory_space<smem>>
    %180 = vector.broadcast %179 : f32 to vector<16x128xf32>
    %181 = arith.mulf %176, %180 : vector<16x128xf32>
    %c0_94 = arith.constant 0 : index
    %182 = arith.index_cast %169 : i32 to index
    %c0_95 = arith.constant 0 : index
    %c0_96 = arith.constant 0 : index
    %183 = vector.load %arg5[%c0_94, %182, %c0_95, %c0_96] : memref<1x8x32x128xf32, #tpu.memory_space<vmem>>, vector<1x1x16x128xf32>
    %184 = vector.shape_cast %183 : vector<1x1x16x128xf32> to vector<16x128xf32>
    %185 = vector.shape_cast %181 : vector<16x128xf32> to vector<1x1x16x128xf32>
    tpu.vector_store %arg5[%c0_94, %182, %c0_95, %c0_96], %185 {strides = array<i32>} : memref<1x8x32x128xf32, #tpu.memory_space<vmem>>, vector<1x1x16x128xf32>,
    %c1_i32_97 = arith.constant 1 : i32
    %186 = arith.addi %170, %c1_i32_97 : i32
    %187 = arith.index_cast %186 : i32 to index
    %188 = memref.load %arg2[%187] : memref<32xi32, #tpu.memory_space<smem>>
    %c0_98 = arith.constant 0 : index
    %189 = arith.index_cast %188 : i32 to index
    %c0_99 = arith.constant 0 : index
    %c0_100 = arith.constant 0 : index
    %190 = vector.load %arg4[%c0_98, %189, %c0_99, %c0_100] : memref<1x8x16x128xf32, #tpu.memory_space<vmem>>, vector<1x1x16x128xf32>
    %191 = vector.shape_cast %190 : vector<1x1x16x128xf32> to vector<16x128xf32>
    %c1_i32_101 = arith.constant 1 : i32
    %192 = arith.addi %170, %c1_i32_101 : i32
    %193 = arith.index_cast %192 : i32 to index
    %194 = memref.load %arg3[%193] : memref<32xf32, #tpu.memory_space<smem>>
    %195 = vector.broadcast %194 : f32 to vector<16x128xf32>
    %196 = arith.mulf %191, %195 : vector<16x128xf32>
    %c0_102 = arith.constant 0 : index
    %197 = arith.index_cast %169 : i32 to index
    %c16_103 = arith.constant 16 : index
    %c0_104 = arith.constant 0 : index
    %198 = vector.load %arg5[%c0_102, %197, %c16_103, %c0_104] : memref<1x8x32x128xf32, #tpu.memory_space<vmem>>, vector<1x1x16x128xf32>
    %199 = vector.shape_cast %198 : vector<1x1x16x128xf32> to vector<16x128xf32>
    %200 = vector.shape_cast %196 : vector<16x128xf32> to vector<1x1x16x128xf32>
    tpu.vector_store %arg5[%c0_102, %197, %c16_103, %c0_104], %200 {strides = array<i32>} : memref<1x8x32x128xf32, #tpu.memory_space<vmem>>, vector<1x1x16x128xf32>,
    %c6_i32_105 = arith.constant 6 : i32
    %201 = arith.addi %6, %c6_i32_105 : i32
    %c12_i32 = arith.constant 12 : i32
    %202 = arith.addi %8, %c12_i32 : i32
    %c0_i32_106 = arith.constant 0 : i32
    %203 = arith.addi %202, %c0_i32_106 : i32
    %204 = arith.index_cast %203 : i32 to index
    %205 = memref.load %arg2[%204] : memref<32xi32, #tpu.memory_space<smem>>
    %c0_107 = arith.constant 0 : index
    %206 = arith.index_cast %205 : i32 to index
    %c0_108 = arith.constant 0 : index
    %c0_109 = arith.constant 0 : index
    %207 = vector.load %arg4[%c0_107, %206, %c0_108, %c0_109] : memref<1x8x16x128xf32, #tpu.memory_space<vmem>>, vector<1x1x16x128xf32>
    %208 = vector.shape_cast %207 : vector<1x1x16x128xf32> to vector<16x128xf32>
    %c0_i32_110 = arith.constant 0 : i32
    %209 = arith.addi %202, %c0_i32_110 : i32
    %210 = arith.index_cast %209 : i32 to index
    %211 = memref.load %arg3[%210] : memref<32xf32, #tpu.memory_space<smem>>
    %212 = vector.broadcast %211 : f32 to vector<16x128xf32>
    %213 = arith.mulf %208, %212 : vector<16x128xf32>
    %c0_111 = arith.constant 0 : index
    %214 = arith.index_cast %201 : i32 to index
    %c0_112 = arith.constant 0 : index
    %c0_113 = arith.constant 0 : index
    %215 = vector.load %arg5[%c0_111, %214, %c0_112, %c0_113] : memref<1x8x32x128xf32, #tpu.memory_space<vmem>>, vector<1x1x16x128xf32>
    %216 = vector.shape_cast %215 : vector<1x1x16x128xf32> to vector<16x128xf32>
    %217 = vector.shape_cast %213 : vector<16x128xf32> to vector<1x1x16x128xf32>
    tpu.vector_store %arg5[%c0_111, %214, %c0_112, %c0_113], %217 {strides = array<i32>} : memref<1x8x32x128xf32, #tpu.memory_space<vmem>>, vector<1x1x16x128xf32>,
    %c1_i32_114 = arith.constant 1 : i32
    %218 = arith.addi %202, %c1_i32_114 : i32
    %219 = arith.index_cast %218 : i32 to index
    %220 = memref.load %arg2[%219] : memref<32xi32, #tpu.memory_space<smem>>
    %c0_115 = arith.constant 0 : index
    %221 = arith.index_cast %220 : i32 to index
    %c0_116 = arith.constant 0 : index
    %c0_117 = arith.constant 0 : index
    %222 = vector.load %arg4[%c0_115, %221, %c0_116, %c0_117] : memref<1x8x16x128xf32, #tpu.memory_space<vmem>>, vector<1x1x16x128xf32>
    %223 = vector.shape_cast %222 : vector<1x1x16x128xf32> to vector<16x128xf32>
    %c1_i32_118 = arith.constant 1 : i32
    %224 = arith.addi %202, %c1_i32_118 : i32
    %225 = arith.index_cast %224 : i32 to index
    %226 = memref.load %arg3[%225] : memref<32xf32, #tpu.memory_space<smem>>
    %227 = vector.broadcast %226 : f32 to vector<16x128xf32>
    %228 = arith.mulf %223, %227 : vector<16x128xf32>
    %c0_119 = arith.constant 0 : index
    %229 = arith.index_cast %201 : i32 to index
    %c16_120 = arith.constant 16 : index
    %c0_121 = arith.constant 0 : index
    %230 = vector.load %arg5[%c0_119, %229, %c16_120, %c0_121] : memref<1x8x32x128xf32, #tpu.memory_space<vmem>>, vector<1x1x16x128xf32>
    %231 = vector.shape_cast %230 : vector<1x1x16x128xf32> to vector<16x128xf32>
    %232 = vector.shape_cast %228 : vector<16x128xf32> to vector<1x1x16x128xf32>
    tpu.vector_store %arg5[%c0_119, %229, %c16_120, %c0_121], %232 {strides = array<i32>} : memref<1x8x32x128xf32, #tpu.memory_space<vmem>>, vector<1x1x16x128xf32>,
    %c7_i32 = arith.constant 7 : i32
    %233 = arith.addi %6, %c7_i32 : i32
    %c14_i32 = arith.constant 14 : i32
    %234 = arith.addi %8, %c14_i32 : i32
    %c0_i32_122 = arith.constant 0 : i32
    %235 = arith.addi %234, %c0_i32_122 : i32
    %236 = arith.index_cast %235 : i32 to index
    %237 = memref.load %arg2[%236] : memref<32xi32, #tpu.memory_space<smem>>
    %c0_123 = arith.constant 0 : index
    %238 = arith.index_cast %237 : i32 to index
    %c0_124 = arith.constant 0 : index
    %c0_125 = arith.constant 0 : index
    %239 = vector.load %arg4[%c0_123, %238, %c0_124, %c0_125] : memref<1x8x16x128xf32, #tpu.memory_space<vmem>>, vector<1x1x16x128xf32>
    %240 = vector.shape_cast %239 : vector<1x1x16x128xf32> to vector<16x128xf32>
    %c0_i32_126 = arith.constant 0 : i32
    %241 = arith.addi %234, %c0_i32_126 : i32
    %242 = arith.index_cast %241 : i32 to index
    %243 = memref.load %arg3[%242] : memref<32xf32, #tpu.memory_space<smem>>
    %244 = vector.broadcast %243 : f32 to vector<16x128xf32>
    %245 = arith.mulf %240, %244 : vector<16x128xf32>
    %c0_127 = arith.constant 0 : index
    %246 = arith.index_cast %233 : i32 to index
    %c0_128 = arith.constant 0 : index
    %c0_129 = arith.constant 0 : index
    %247 = vector.load %arg5[%c0_127, %246, %c0_128, %c0_129] : memref<1x8x32x128xf32, #tpu.memory_space<vmem>>, vector<1x1x16x128xf32>
    %248 = vector.shape_cast %247 : vector<1x1x16x128xf32> to vector<16x128xf32>
    %249 = vector.shape_cast %245 : vector<16x128xf32> to vector<1x1x16x128xf32>
    tpu.vector_store %arg5[%c0_127, %246, %c0_128, %c0_129], %249 {strides = array<i32>} : memref<1x8x32x128xf32, #tpu.memory_space<vmem>>, vector<1x1x16x128xf32>,
    %c1_i32_130 = arith.constant 1 : i32
    %250 = arith.addi %234, %c1_i32_130 : i32
    %251 = arith.index_cast %250 : i32 to index
    %252 = memref.load %arg2[%251] : memref<32xi32, #tpu.memory_space<smem>>
    %c0_131 = arith.constant 0 : index
    %253 = arith.index_cast %252 : i32 to index
    %c0_132 = arith.constant 0 : index
    %c0_133 = arith.constant 0 : index
    %254 = vector.load %arg4[%c0_131, %253, %c0_132, %c0_133] : memref<1x8x16x128xf32, #tpu.memory_space<vmem>>, vector<1x1x16x128xf32>
    %255 = vector.shape_cast %254 : vector<1x1x16x128xf32> to vector<16x128xf32>
    %c1_i32_134 = arith.constant 1 : i32
    %256 = arith.addi %234, %c1_i32_134 : i32
    %257 = arith.index_cast %256 : i32 to index
    %258 = memref.load %arg3[%257] : memref<32xf32, #tpu.memory_space<smem>>
    %259 = vector.broadcast %258 : f32 to vector<16x128xf32>
    %260 = arith.mulf %255, %259 : vector<16x128xf32>
    %c0_135 = arith.constant 0 : index
    %261 = arith.index_cast %233 : i32 to index
    %c16_136 = arith.constant 16 : index
    %c0_137 = arith.constant 0 : index
    %262 = vector.load %arg5[%c0_135, %261, %c16_136, %c0_137] : memref<1x8x32x128xf32, #tpu.memory_space<vmem>>, vector<1x1x16x128xf32>
    %263 = vector.shape_cast %262 : vector<1x1x16x128xf32> to vector<16x128xf32>
    %264 = vector.shape_cast %260 : vector<16x128xf32> to vector<1x1x16x128xf32>
    tpu.vector_store %arg5[%c0_135, %261, %c16_136, %c0_137], %264 {strides = array<i32>} : memref<1x8x32x128xf32, #tpu.memory_space<vmem>>, vector<1x1x16x128xf32>,
    %c1_i32_138 = arith.constant 1 : i32
    return
  }
  func.func @transform_0(%arg0: i32, %arg1: i32, %arg2: memref<32xi32, #tpu.memory_space<smem>>, %arg3: memref<32xf32, #tpu.memory_space<smem>>) -> (i32, i32, i32, i32) {
    %c0_i32 = arith.constant 0 : i32
    %c0_i32_0 = arith.constant 0 : i32
    %c0_i32_1 = arith.constant 0 : i32
    %c0_i32_2 = arith.constant 0 : i32
    return %arg0, %c0_i32, %c0_i32_0, %c0_i32_1 : i32, i32, i32, i32
  }
  func.func @transform_1(%arg0: i32, %arg1: i32, %arg2: memref<32xi32, #tpu.memory_space<smem>>, %arg3: memref<32xf32, #tpu.memory_space<smem>>) -> (i32, i32, i32, i32) {
    %c0_i32 = arith.constant 0 : i32
    %c0_i32_0 = arith.constant 0 : i32
    %c0_i32_1 = arith.constant 0 : i32
    return %arg0, %arg1, %c0_i32, %c0_i32_0 : i32, i32, i32, i32
  }
}

</mosaic_0001>

<llo_original>
// kernel: tpu_custom_call.1
$region0: #{tpu_custom_call.1}
  #allocation0 [shape = 'u32[]', space=smem, size = 0x4, offset = 0x4, fixed_abs, tag = 'smem constant byte address 0x4 - core index']
  #allocation1 [shape = 'u32[144,128]{1,0:T(1,128)}', space=vmem, size = 0x12000, scoped, tag = 'internal scratch']
  #allocation2 [shape = 's32[1]{0}', space=sflag, size = 0x4, scoped, tag = 'scoped memory for tpu_custom_call.1']
  #allocation3 [shape = 'u8[512]{0}', space=smem, size = 0x200, scoped, tag = 'prefetched SMEM operand 0']
  #allocation4 [shape = 'u8[512]{0}', space=smem, size = 0x200, scoped, tag = 'prefetched SMEM operand 1']
  %s0 = inlined_call_operand.hbm [shape: s32[32], index: 0, kind: input, shape index: {}]
  %s1 = inlined_call_operand.vmem [shape: f32[32], index: 1, kind: input, shape index: {}]
  %s2 = inlined_call_operand.hbm [shape: f32[2,8,16,128], index: 2, kind: input, shape index: {}]
  %s3 = inlined_call_operand.hbm [shape: f32[2,8,32,128], index: 3, kind: output, shape index: {}]
  %s4 = sld [smem:[#allocation0]]
  $region41: #{tpu_custom_call.1} parent=0
    _
  %s6 = ssub.s32 1, %s4
  %s7 = scalar_select 0, %s6, %s4
  %9 = dma.hbm_to_smem %s0, 16, [#allocation3], [#allocation2]
  %s10 = sshll.u32 %s1, 4
  %s11 = int_to_ptr.vmem [resolvable:$true] %s10
  %13 = dma.vmem_to_smem %s11, 16, [#allocation4], [#allocation2]
  %14 = dma.done [#allocation2], 32
  %15 = sfence
  $region1: #{tpu_custom_call.1} parent=0
    #allocation5 [shape = 'u8[131072]{0}', space=vmem, size = 0x20000, scoped, tag = 'input window, operand 2']
    #allocation6 [shape = 's32[2]{0}', space=sflag, size = 0x8, scoped, tag = 'scoped memory for tpu_custom_call.1']
    #allocation7 [shape = 's32[2]{0}', space=sflag, size = 0x8, scoped, tag = 'scoped memory for tpu_custom_call.1']
    #allocation8 [shape = 'u8[262144]{0}', space=vmem, size = 0x40000, scoped, tag = 'output window, operand 0']
    %16 = vsyncpa [#allocation6], 0
    %s17 = scalar_lea.sflag [#allocation6], 1
    %18 = vsyncpa %s17, 0
    %19 = vsyncpa [#allocation7], 0
    %s20 = scalar_lea.sflag [#allocation7], 1
    %21 = vsyncpa %s20, 0
    loop: start=0, step=1, limit=4
    $region2: #{tpu_custom_call.1} parent=1 // loop_pre_header
      _
    $region3: #{tpu_custom_call.1} parent=1 // loop_header
      %s23 = sphi 0, %s27
      %p24 = scmp.ge.s32.totalorder %s23, 4
      %s30 = sphi 0, %s42
      %s31 = sphi 0, %s38
      %s32 = sphi 0, %s30
      %s33 = sphi 0, %s31
      %s34 = sphi 0, %s32
      %s35 = sphi 0, %s33
      %s45 = sphi 0, %s47
      %s48 = sphi 0, %s45
      %s49 = sphi 0, %s48
      %s65 = sphi 0, %s49
      %s73 = sphi 0, %s75
      %s76 = sphi 0, %s73
      %s77 = sphi 0, %s76
      %s93 = sphi 0, %s77
    $region4: #{tpu_custom_call.1} parent=1 // loop_header_branch
      %26 = sbr.rel (%p24) target = $region8
    $region5: #{tpu_custom_call.1} parent=1 // loop_body
      %s28 = ssub.s32 %s23, 1
      %s29 = ssub.s32 %s23, 2
      %s36 = sadd.s32 1, %s31
      %p37 = scmp.ge.s32.totalorder %s36, 1
      %s38 = scalar_select %p37, 0, %s36
      %s39 = sadd.s32 1, %s30
      %s40 = scalar_select %p37, %s39, %s30
      %p41 = scmp.ge.s32.totalorder %s40, 2
      %s42 = scalar_select %p41, 0, %s40
      %s43 = ssub.s32 %s30, %s42
      %p44 = scmp.eq.s32.totalorder %s43, 0
      %s46 = sadd.s32 %s45, 1
      %s47 = scalar_select %p44, %s45, %s46
      %p50 = pneg %p44
      %p51 = scmp.eq.s32.totalorder %s23, 1
      %p52 = por %p50, %p51
      %p53 = scmp.ne.s32.totalorder %s45, %s48
      %p54 = scmp.eq.s32.totalorder %s23, 0
      %p55 = por %p53, %p54
      %p56 = scmp.ne.s32.totalorder %s45, %s48
      %p57 = scmp.eq.s32.totalorder %s28, 1
      %p58 = por %p56, %p57
      %p59 = scmp.ne.s32.totalorder %s48, %s49
      %p60 = scmp.eq.s32.totalorder %s28, 0
      %p61 = por %p59, %p60
      %p62 = scmp.ne.s32.totalorder %s48, %s49
      %p63 = scmp.eq.s32.totalorder %s29, 1
      %p64 = por %p62, %p63
      %p66 = scmp.ne.s32.totalorder %s49, %s65
      %p67 = scmp.eq.s32.totalorder %s29, 0
      %p68 = por %p66, %p67
      %s69 = ssub.s32 %s30, %s42
      %s70 = ssub.s32 %s31, %s38
      %s71 = sor.u32 %s69, %s70
      %p72 = scmp.eq.s32.totalorder %s71, 0
      %s74 = sadd.s32 %s73, 1
      %s75 = scalar_select %p72, %s73, %s74
      %p78 = pneg %p72
      %p79 = scmp.eq.s32.totalorder %s23, 1
      %p80 = por %p78, %p79
      %p81 = scmp.ne.s32.totalorder %s73, %s76
      %p82 = scmp.eq.s32.totalorder %s23, 0
      %p83 = por %p81, %p82
      %p84 = scmp.ne.s32.totalorder %s73, %s76
      %p85 = scmp.eq.s32.totalorder %s28, 1
      %p86 = por %p84, %p85
      %p87 = scmp.ne.s32.totalorder %s76, %s77
      %p88 = scmp.eq.s32.totalorder %s28, 0
      %p89 = por %p87, %p88
      %p90 = scmp.ne.s32.totalorder %s76, %s77
      %p91 = scmp.eq.s32.totalorder %s29, 1
      %p92 = por %p90, %p91
      %p94 = scmp.ne.s32.totalorder %s77, %s93
      %p95 = scmp.eq.s32.totalorder %s29, 0
      %p96 = por %p94, %p95
      %p97 = scmp.le.s32.totalorder 1, %s23
      %p98 = scmp.lt.s32.totalorder %s23, 3
      %p99 = pnand %p97, %p98
      %p100 = pneg %p99
      // Predicated region
      $region9: #{tpu_custom_call.1} parent=5 // pred_check
        _
      $region10: #{tpu_custom_call.1} parent=5 // pred_check_branch
        %102 = sbr.rel (%p99) target = $region12
      $region11: #{tpu_custom_call.1} parent=5 // pred_region
        %s103 = ssub.s32 %s23, 1
      $region12: #{tpu_custom_call.1} parent=5 // pred_fallthru
        _
      %p104 = scmp.lt.s32.totalorder %s23, 2
      // Predicated region
      $region13: #{tpu_custom_call.1} parent=5 // pred_check
        %p105 = pneg %p104
      $region14: #{tpu_custom_call.1} parent=5 // pred_check_branch
        %107 = sbr.rel (%p105) target = $region16
      $region15: #{tpu_custom_call.1} parent=5 // pred_region
        // Predicated region
        $region17: #{tpu_custom_call.1} parent=15 // pred_check
          %p108 = pneg %p55
        $region18: #{tpu_custom_call.1} parent=15 // pred_check_branch
          %110 = sbr.rel (%p108) target = $region20
        $region19: #{tpu_custom_call.1} parent=15 // pred_region
          %s111 = sand.u32 %s45, 1
          %s112 = scalar_lea.sflag [#allocation6], %s111
          %s113 = sand.u32 %s45, 1
          %s114 = smul.addr %s113, 128
          %s115 = scalar_lea.vmem [#allocation5], %s114
          %s117 = ssub.s32 2048, 2048
          %118 = vsyncadd %s112, %s117
          %s119 = smul.addr %s30, 16
          %s120 = smul.addr %s119, 128
          %s121 = scalar_lea.hbm %s2, %s120
          %s122 = sshll.u32 %s115, 4
          %s123 = int_to_ptr.vmem [resolvable:$true] %s122
          %128 = dma.hbm_to_vmem [thread:$0]  %s121, 2048, %s123, %s112, 128, 128, 8
        $region20: #{tpu_custom_call.1} parent=15 // pred_fallthru
          _
      $region16: #{tpu_custom_call.1} parent=5 // pred_fallthru
        _
      %p129 = scmp.le.s32.totalorder 1, %s23
      %p130 = scmp.lt.s32.totalorder %s23, 3
      %p131 = pnand %p129, %p130
      %p132 = pneg %p131
      // Predicated region
      $region21: #{tpu_custom_call.1} parent=5 // pred_check
        _
      $region22: #{tpu_custom_call.1} parent=5 // pred_check_branch
        %134 = sbr.rel (%p131) target = $region24
      $region23: #{tpu_custom_call.1} parent=5 // pred_region
        %s135 = ssub.s32 %s23, 1
        %s136 = sand.u32 %s48, 1
        %s137 = scalar_lea.sflag [#allocation6], %s136
        %s138 = sand.u32 %s48, 1
        %s139 = smul.addr %s138, 128
        %s140 = scalar_lea.vmem [#allocation5], %s139
        // Predicated region
        $region25: #{tpu_custom_call.1} parent=23 // pred_check
          %p141 = pneg %p61
        $region26: #{tpu_custom_call.1} parent=23 // pred_check_branch
          %143 = sbr.rel (%p141) target = $region28
        $region27: #{tpu_custom_call.1} parent=23 // pred_region
          %144 = dma.done %s137, 2048
        $region28: #{tpu_custom_call.1} parent=23 // pred_fallthru
          _
        %s145 = sand.u32 %s48, 1
        %s146 = scalar_lea.sflag [#allocation6], %s145
        %s147 = sand.u32 %s48, 1
        %s148 = smul.addr %s147, 128
        %s149 = scalar_lea.vmem [#allocation5], %s148
        %p150 = pneg %p61
        %p151 = pneg %p58
        %p152 = pneg %p89
        %p153 = pneg %p86
        %s154 = sand.u32 %s76, 1
        %s155 = scalar_lea.sflag [#allocation7], %s154
        %s156 = sand.u32 %s76, 1
        %s157 = smul.addr %s156, 256
        %s158 = scalar_lea.vmem [#allocation8], %s157
        %s159 = smul.u32 8, %s33
        %s160 = smul.u32 %s32, 8
        %s161 = smul.u32 %s33, 8
        %s162 = sadd.s32 %s160, %s161
        %s163 = smul.u32 %s162, 2
        %s164 = sld [smem:[#allocation3 + %s163]]
        %s165 = smul.u32 %s164, 16
        %s166 = scalar_lea.vmem %s140, %s165 [#allocation5]
        %v167 = vld [vmem:[%s166] sm:$0xff]
        %v168 = vld [vmem:[%s166 + $0x8] sm:$0xff]
        %s169 = sld [smem:[#allocation4 + %s163]]
        %v170 = vstv %s169
        %v171 = vmul.f32 %v167, %v170
        %v172 = vmul.f32 %v168, %v170
        %173 = vst [vmem:[%s158] sm:$0xff] %v171
        %174 = vst [vmem:[%s158 + $0x8] sm:$0xff] %v172
        %s175 = sadd.s32 %s163, 1
        %s176 = sld [smem:[#allocation3 + %s175]]
        %s177 = smul.u32 %s176, 16
        %s178 = scalar_lea.vmem %s140, %s177 [#allocation5]
        %v179 = vld [vmem:[%s178] sm:$0xff]
        %v180 = vld [vmem:[%s178 + $0x8] sm:$0xff]
        %s181 = sld [smem:[#allocation4 + %s175]]
        %v182 = vstv %s181
        %v183 = vmul.f32 %v179, %v182
        %v184 = vmul.f32 %v180, %v182
        %185 = vst [vmem:[%s158 + $0x10] sm:$0xff] %v183
        %186 = vst [vmem:[%s158 + $0x18] sm:$0xff] %v184
        %s187 = sadd.s32 %s163, 2
        %s188 = sld [smem:[#allocation3 + %s187]]
        %s189 = smul.u32 %s188, 16
        %s190 = scalar_lea.vmem %s140, %s189 [#allocation5]
        %v191 = vld [vmem:[%s190] sm:$0xff]
        %v192 = vld [vmem:[%s190 + $0x8] sm:$0xff]
        %s193 = sld [smem:[#allocation4 + %s187]]
        %v194 = vstv %s193
        %v195 = vmul.f32 %v191, %v194
        %v196 = vmul.f32 %v192, %v194
        %s197 = scalar_lea.vmem %s158, 32 [#allocation8]
        %198 = vst [vmem:[%s197] sm:$0xff] %v195
        %199 = vst [vmem:[%s197 + $0x8] sm:$0xff] %v196
        %s200 = sadd.s32 %s163, 3
        %s201 = sld [smem:[#allocation3 + %s200]]
        %s202 = smul.u32 %s201, 16
        %s203 = scalar_lea.vmem %s140, %s202 [#allocation5]
        %v204 = vld [vmem:[%s203] sm:$0xff]
        %v205 = vld [vmem:[%s203 + $0x8] sm:$0xff]
        %s206 = sld [smem:[#allocation4 + %s200]]
        %v207 = vstv %s206
        %v208 = vmul.f32 %v204, %v207
        %v209 = vmul.f32 %v205, %v207
        %210 = vst [vmem:[%s197 + $0x10] sm:$0xff] %v208
        %211 = vst [vmem:[%s197 + $0x18] sm:$0xff] %v209
        %s212 = sadd.s32 %s163, 4
        %s213 = sld [smem:[#allocation3 + %s212]]
        %s214 = smul.u32 %s213, 16
        %s215 = scalar_lea.vmem %s140, %s214 [#allocation5]
        %v216 = vld [vmem:[%s215] sm:$0xff]
        %v217 = vld [vmem:[%s215 + $0x8] sm:$0xff]
        %s218 = sld [smem:[#allocation4 + %s212]]
        %v219 = vstv %s218
        %v220 = vmul.f32 %v216, %v219
        %v221 = vmul.f32 %v217, %v219
        %s222 = scalar_lea.vmem %s158, 64 [#allocation8]
        %223 = vst [vmem:[%s222] sm:$0xff] %v220
        %224 = vst [vmem:[%s222 + $0x8] sm:$0xff] %v221
        %s225 = sadd.s32 %s163, 5
        %s226 = sld [smem:[#allocation3 + %s225]]
        %s227 = smul.u32 %s226, 16
        %s228 = scalar_lea.vmem %s140, %s227 [#allocation5]
        %v229 = vld [vmem:[%s228] sm:$0xff]
        %v230 = vld [vmem:[%s228 + $0x8] sm:$0xff]
        %s231 = sld [smem:[#allocation4 + %s225]]
        %v232 = vstv %s231
        %v233 = vmul.f32 %v229, %v232
        %v234 = vmul.f32 %v230, %v232
        %235 = vst [vmem:[%s222 + $0x10] sm:$0xff] %v233
        %236 = vst [vmem:[%s222 + $0x18] sm:$0xff] %v234
        %s237 = sadd.s32 %s163, 6
        %s238 = sld [smem:[#allocation3 + %s237]]
        %s239 = smul.u32 %s238, 16
        %s240 = scalar_lea.vmem %s140, %s239 [#allocation5]
        %v241 = vld [vmem:[%s240] sm:$0xff]
        %v242 = vld [vmem:[%s240 + $0x8] sm:$0xff]
        %s243 = sld [smem:[#allocation4 + %s237]]
        %v244 = vstv %s243
        %v245 = vmul.f32 %v241, %v244
        %v246 = vmul.f32 %v242, %v244
        %s247 = scalar_lea.vmem %s158, 96 [#allocation8]
        %248 = vst [vmem:[%s247] sm:$0xff] %v245
        %249 = vst [vmem:[%s247 + $0x8] sm:$0xff] %v246
        %s250 = sadd.s32 %s163, 7
        %s251 = sld [smem:[#allocation3 + %s250]]
        %s252 = smul.u32 %s251, 16
        %s253 = scalar_lea.vmem %s140, %s252 [#allocation5]
        %v254 = vld [vmem:[%s253] sm:$0xff]
        %v255 = vld [vmem:[%s253 + $0x8] sm:$0xff]
        %s256 = sld [smem:[#allocation4 + %s250]]
        %v257 = vstv %s256
        %v258 = vmul.f32 %v254, %v257
        %v259 = vmul.f32 %v255, %v257
        %260 = vst [vmem:[%s247 + $0x10] sm:$0xff] %v258
        %261 = vst [vmem:[%s247 + $0x18] sm:$0xff] %v259
        %s262 = sadd.s32 %s163, 8
        %s263 = sld [smem:[#allocation3 + %s262]]
        %s264 = smul.u32 %s263, 16
        %s265 = scalar_lea.vmem %s140, %s264 [#allocation5]
        %v266 = vld [vmem:[%s265] sm:$0xff]
        %v267 = vld [vmem:[%s265 + $0x8] sm:$0xff]
        %s268 = sld [smem:[#allocation4 + %s262]]
        %v269 = vstv %s268
        %v270 = vmul.f32 %v266, %v269
        %v271 = vmul.f32 %v267, %v269
        %s272 = scalar_lea.vmem %s158, 128 [#allocation8]
        %273 = vst [vmem:[%s272] sm:$0xff] %v270
        %274 = vst [vmem:[%s272 + $0x8] sm:$0xff] %v271
        %s275 = sadd.s32 %s163, 9
        %s276 = sld [smem:[#allocation3 + %s275]]
        %s277 = smul.u32 %s276, 16
        %s278 = scalar_lea.vmem %s140, %s277 [#allocation5]
        %v279 = vld [vmem:[%s278] sm:$0xff]
        %v280 = vld [vmem:[%s278 + $0x8] sm:$0xff]
        %s281 = sld [smem:[#allocation4 + %s275]]
        %v282 = vstv %s281
        %v283 = vmul.f32 %v279, %v282
        %v284 = vmul.f32 %v280, %v282
        %285 = vst [vmem:[%s272 + $0x10] sm:$0xff] %v283
        %286 = vst [vmem:[%s272 + $0x18] sm:$0xff] %v284
        %s287 = sadd.s32 %s163, 10
        %s288 = sld [smem:[#allocation3 + %s287]]
        %s289 = smul.u32 %s288, 16
        %s290 = scalar_lea.vmem %s140, %s289 [#allocation5]
        %v291 = vld [vmem:[%s290] sm:$0xff]
        %v292 = vld [vmem:[%s290 + $0x8] sm:$0xff]
        %s293 = sld [smem:[#allocation4 + %s287]]
        %v294 = vstv %s293
        %v295 = vmul.f32 %v291, %v294
        %v296 = vmul.f32 %v292, %v294
        %s297 = scalar_lea.vmem %s158, 160 [#allocation8]
        %298 = vst [vmem:[%s297] sm:$0xff] %v295
        %299 = vst [vmem:[%s297 + $0x8] sm:$0xff] %v296
        %s300 = sadd.s32 %s163, 11
        %s301 = sld [smem:[#allocation3 + %s300]]
        %s302 = smul.u32 %s301, 16
        %s303 = scalar_lea.vmem %s140, %s302 [#allocation5]
        %v304 = vld [vmem:[%s303] sm:$0xff]
        %v305 = vld [vmem:[%s303 + $0x8] sm:$0xff]
        %s306 = sld [smem:[#allocation4 + %s300]]
        %v307 = vstv %s306
        %v308 = vmul.f32 %v304, %v307
        %v309 = vmul.f32 %v305, %v307
        %310 = vst [vmem:[%s297 + $0x10] sm:$0xff] %v308
        %311 = vst [vmem:[%s297 + $0x18] sm:$0xff] %v309
        %s312 = sadd.s32 %s163, 12
        %s313 = sld [smem:[#allocation3 + %s312]]
        %s314 = smul.u32 %s313, 16
        %s315 = scalar_lea.vmem %s140, %s314 [#allocation5]
        %v316 = vld [vmem:[%s315] sm:$0xff]
        %v317 = vld [vmem:[%s315 + $0x8] sm:$0xff]
        %s318 = sld [smem:[#allocation4 + %s312]]
        %v319 = vstv %s318
        %v320 = vmul.f32 %v316, %v319
        %v321 = vmul.f32 %v317, %v319
        %s322 = scalar_lea.vmem %s158, 192 [#allocation8]
        %323 = vst [vmem:[%s322] sm:$0xff] %v320
        %324 = vst [vmem:[%s322 + $0x8] sm:$0xff] %v321
        %s325 = sadd.s32 %s163, 13
        %s326 = sld [smem:[#allocation3 + %s325]]
        %s327 = smul.u32 %s326, 16
        %s328 = scalar_lea.vmem %s140, %s327 [#allocation5]
        %v329 = vld [vmem:[%s328] sm:$0xff]
        %v330 = vld [vmem:[%s328 + $0x8] sm:$0xff]
        %s331 = sld [smem:[#allocation4 + %s325]]
        %v332 = vstv %s331
        %v333 = vmul.f32 %v329, %v332
        %v334 = vmul.f32 %v330, %v332
        %335 = vst [vmem:[%s322 + $0x10] sm:$0xff] %v333
        %336 = vst [vmem:[%s322 + $0x18] sm:$0xff] %v334
        %s337 = sadd.s32 %s163, 14
        %s338 = sld [smem:[#allocation3 + %s337]]
        %s339 = smul.u32 %s338, 16
        %s340 = scalar_lea.vmem %s140, %s339 [#allocation5]
        %v341 = vld [vmem:[%s340] sm:$0xff]
        %v342 = vld [vmem:[%s340 + $0x8] sm:$0xff]
        %s343 = sld [smem:[#allocation4 + %s337]]
        %v344 = vstv %s343
        %v345 = vmul.f32 %v341, %v344
        %v346 = vmul.f32 %v342, %v344
        %s347 = scalar_lea.vmem %s158, 224 [#allocation8]
        %348 = vst [vmem:[%s347] sm:$0xff] %v345
        %349 = vst [vmem:[%s347 + $0x8] sm:$0xff] %v346
        %s350 = sadd.s32 %s163, 15
        %s351 = sld [smem:[#allocation3 + %s350]]
        %s352 = smul.u32 %s351, 16
        %s353 = scalar_lea.vmem %s140, %s352 [#allocation5]
        %v354 = vld [vmem:[%s353] sm:$0xff]
        %v355 = vld [vmem:[%s353 + $0x8] sm:$0xff]
        %s356 = sld [smem:[#allocation4 + %s350]]
        %v357 = vstv %s356
        %v358 = vmul.f32 %v354, %v357
        %v359 = vmul.f32 %v355, %v357
        %360 = vst [vmem:[%s347 + $0x10] sm:$0xff] %v358
        %361 = vst [vmem:[%s347 + $0x18] sm:$0xff] %v359
        %s362 = sand.u32 %s76, 1
        %s363 = scalar_lea.sflag [#allocation7], %s362
        %s364 = sand.u32 %s76, 1
        %s365 = smul.addr %s364, 256
        %s366 = scalar_lea.vmem [#allocation8], %s365
        // Predicated region
        $region29: #{tpu_custom_call.1} parent=23 // pred_check
          %p367 = pneg %p86
        $region30: #{tpu_custom_call.1} parent=23 // pred_check_branch
          %369 = sbr.rel (%p367) target = $region32
        $region31: #{tpu_custom_call.1} parent=23 // pred_region
          %s370 = smul.u32 8, %s33
          %s372 = ssub.s32 4096, 4096
          %373 = vsyncadd %s363, %s372
          %s374 = smul.addr %s370, 4
          %s375 = smul.addr %s32, 32
          %s376 = sadd.s32 %s374, %s375
          %s377 = smul.addr %s376, 128
          %s378 = scalar_lea.hbm %s3, %s377
          %s379 = sshll.u32 %s366, 4
          %s380 = int_to_ptr.vmem [resolvable:$true] %s379
          %385 = dma.vmem_to_hbm [thread:$0]  %s380, 4096, %s378, %s363, 128, 128, 8
        $region32: #{tpu_custom_call.1} parent=23 // pred_fallthru
          _
      $region24: #{tpu_custom_call.1} parent=5 // pred_fallthru
        _
      %p386 = scmp.le.s32.totalorder 2, %s23
      // Predicated region
      $region33: #{tpu_custom_call.1} parent=5 // pred_check
        %p387 = pneg %p386
      $region34: #{tpu_custom_call.1} parent=5 // pred_check_branch
        %389 = sbr.rel (%p387) target = $region36
      $region35: #{tpu_custom_call.1} parent=5 // pred_region
        %s390 = ssub.s32 %s23, 2
        // Predicated region
        $region37: #{tpu_custom_call.1} parent=35 // pred_check
          %p391 = pneg %p92
        $region38: #{tpu_custom_call.1} parent=35 // pred_check_branch
          %393 = sbr.rel (%p391) target = $region40
        $region39: #{tpu_custom_call.1} parent=35 // pred_region
          %s394 = sand.u32 %s77, 1
          %s395 = scalar_lea.sflag [#allocation7], %s394
          %s396 = sand.u32 %s77, 1
          %s397 = smul.addr %s396, 256
          %s398 = scalar_lea.vmem [#allocation8], %s397
          %399 = dma.done %s395, 4096
        $region40: #{tpu_custom_call.1} parent=35 // pred_fallthru
          _
      $region36: #{tpu_custom_call.1} parent=5 // pred_fallthru
        _
    $region6: #{tpu_custom_call.1} parent=1 // loop_footer
      %s27 = sadd.s32 1, %s23
    $region7: #{tpu_custom_call.1} parent=1 // loop_footer_branch
      %22 = sbr.rel target = $region3
    $region8: #{tpu_custom_call.1} parent=1 // loop_exit
      _
    %400 = vsyncpa [#allocation6], 1
    %s401 = scalar_lea.sflag [#allocation6], 1
    %402 = vsyncpa %s401, 1
    %403 = vsyncpa [#allocation7], 1
    %s404 = scalar_lea.sflag [#allocation7], 1
    %405 = vsyncpa %s404, 1

</llo_original>
